<compile_context>
chip_gen: v7x
topology: tpu7x:2x2x1
jax: 0.10.0
libtpu: 0.0.40
codegen_flags: <defaults>
</compile_context>

<pallas_src>
import functools

import jax
import jax.numpy as jnp
from jax.experimental import pallas as pl
from jax.experimental.pallas import tpu as pltpu


# ---------------------------------------------------------------------------
# Kernel
# ---------------------------------------------------------------------------
def _reslayer_kernel(skip,
                     x_ref,
                     w1_ref, b1_ref,
                     w2_ref, b2_ref,
                     w3_ref, b3_ref,
                     o_ref):
    """ResLayer forward for one (channels, tm-pixels) slab.

    x_ref : (Cin,  tm)     pixel slab (lane axis = pixels)
    wK_ref: (CoutK, CinK)  BN-folded 1x1 conv weight (compute dtype)
    bK_ref: (CoutK, 1)     BN+bias folded shift (f32)
    o_ref : (Cout3, tm)
    """
    cdt = w1_ref.dtype
    x = x_ref[...]

    # conv1 (+bn1 folded) + relu   -- f32 accumulation on the MXU
    h = jnp.dot(w1_ref[...], x, preferred_element_type=jnp.float32) + b1_ref[...]
    h = jnp.maximum(h, 0.0)

    # conv2 (+bn2 folded) + relu
    h = jnp.dot(w2_ref[...], h.astype(cdt),
                preferred_element_type=jnp.float32) + b2_ref[...]
    h = jnp.maximum(h, 0.0)

    # conv3 (+bn3 folded)
    h = jnp.dot(w3_ref[...], h.astype(cdt),
                preferred_element_type=jnp.float32) + b3_ref[...]

    # skip connection (active when inplanes == planes * expansion)
    if skip:
        h = h + x.astype(jnp.float32)

    # final relu
    o_ref[...] = jnp.maximum(h, 0.0).astype(o_ref.dtype)


# ---------------------------------------------------------------------------
# Wrapper helpers
# ---------------------------------------------------------------------------
def _fold_bn(gamma, beta, mean, var, eps=1e-5):
    scale = gamma * jax.lax.rsqrt(var + eps)
    shift = beta - mean * scale
    return scale, shift


def _vmem_budget_bytes():
    """Generation-aware VMEM budget with headroom for compiler scratch."""
    cap = 64 * 2 ** 20                      # conservative default = v7x per-TC VMEM
    try:
        cap = int(pltpu.get_tpu_info().vmem_capacity_bytes)
    except Exception:
        pass
    return int(cap * 3 // 4)                # ~48 MiB on v7x, ~96 MiB on v5e/v6e


def _pick_tm(n_pixels, cin, cmid, cout, in_isz, out_isz, vmem_budget, max_tm):
    """Pixel-tile size: VMEM-aware, grid-aware, tail-friendly multiple of 128."""
    if n_pixels <= 128:
        return n_pixels                     # block == full lane extent (allowed)

    # Conservative VMEM model: double-buffered x/out slabs + weights (counted x2
    # even if single-buffered) + f32 intermediates + bf16 cast copies.
    fixed = 2 * ((cin * cmid + cmid * cmid + cmid * cout) * in_isz
                 + (2 * cmid + cout) * 4)
    per_pixel = (2 * cin * in_isz + 2 * cout * out_isz
                 + 4 * (cmid + max(cmid, cout))
                 + in_isz * (cmid + cout))
    tm_vmem = max(128, (vmem_budget - fixed) // per_pixel)

    tm = min(max_tm, tm_vmem, n_pixels)
    tm = max(128, (tm // 128) * 128)

    # Keep >= 4 pixel blocks when possible so both v7x TensorCores get work and
    # the software pipeline has something to overlap.
    if n_pixels >= 4 * 128:
        cap4 = max(128, (pl.cdiv(n_pixels, 4) // 128) * 128)
        tm = min(tm, cap4)

    # Prefer a tile that divides n_pixels (avoids a masked partial tail block).
    if n_pixels % tm:
        for cand in range(tm, 127, -128):
            if n_pixels % cand == 0:
                if cand * 2 >= tm:
                    tm = cand
                break
    return int(tm)


# ---------------------------------------------------------------------------
# Public forward
# ---------------------------------------------------------------------------
def reslayer_forward(x_nchw, params, *, compute_dtype=jnp.bfloat16, out_dtype=None,
                     bn_eps=1e-5, max_tm=2048):
    """ResLayer forward. x_nchw: (N, Cin, H, W) -> (N, Cout, H, W).

    compute_dtype: dtype of x / folded weights fed to the MXU (accumulation f32).
    out_dtype:     output dtype; None => compute_dtype (bf16 halves HBM writeback).
    """
    N, Cin, H, W = x_nchw.shape
    HW = H * W

    if out_dtype is None:
        out_dtype = compute_dtype

    w1, b1, bn1 = params["conv1"], params["bias1"], params["bn1"]
    w2, b2, bn2 = params["conv2"], params["bias2"], params["bn2"]
    w3, b3, bn3 = params["conv3"], params["bias3"], params["bn3"]
    Cmid = w1.shape[0]
    Cout = w3.shape[0]
    skip = (Cin == Cout)

    # Fold BN + conv bias into the weights:  y = s*(Wx + b) + t = (s*W)x + (s*b + t)
    s1, t1 = _fold_bn(*bn1, eps=bn_eps)
    s2, t2 = _fold_bn(*bn2, eps=bn_eps)
    s3, t3 = _fold_bn(*bn3, eps=bn_eps)
    w1f = (w1[:, :, 0, 0] * s1[:, None]).astype(compute_dtype)      # (Cmid, Cin)
    w2f = (w2[:, :, 0, 0] * s2[:, None]).astype(compute_dtype)      # (Cmid, Cmid)
    w3f = (w3[:, :, 0, 0] * s3[:, None]).astype(compute_dtype)      # (Cout, Cmid)
    b1f = (b1 * s1 + t1).astype(jnp.float32)[:, None]               # (Cmid, 1)
    b2f = (b2 * s2 + t2).astype(jnp.float32)[:, None]               # (Cmid, 1)
    b3f = (b3 * s3 + t3).astype(jnp.float32)[:, None]               # (Cout, 1)
    w_shapes = [(Cmid, Cin), (Cmid, 1), (Cmid, Cmid), (Cmid, 1), (Cout, Cmid), (Cout, 1)]

    in_isz = jnp.dtype(compute_dtype).itemsize
    out_isz = jnp.dtype(out_dtype).itemsize
    vmem_budget = _vmem_budget_bytes()

    flops = 2 * N * HW * (Cin * Cmid + Cmid * Cmid + Cmid * Cout)
    w_bytes = (Cin * Cmid + Cmid * Cmid + Cmid * Cout) * in_isz + (2 * Cmid + Cout) * 4
    bytes_accessed = N * HW * (Cin * in_isz + Cout * out_isz) + w_bytes

    use_flat = HW < 128   # small (7x7/14x14) feature maps: keep output lane-dense

    if use_flat:
        # Lane-dense path: pixels of all images on one lane axis.
        P = N * HW
        tm = _pick_tm(P, Cin, Cmid, Cout, in_isz, out_isz, vmem_budget, max_tm)
        xv = jnp.transpose(x_nchw.reshape(N, Cin, HW), (1, 0, 2)) \
                .reshape(Cin, P).astype(compute_dtype)
        grid = (pl.cdiv(P, tm),)
        x_spec = pl.BlockSpec((Cin, tm), lambda p: (0, p))
        o_spec = pl.BlockSpec((Cout, tm), lambda p: (0, p))
        wmap = lambda p: (0, 0)
        out_arr_shape = (Cout, P)
        dim_sem = ("parallel",)
    else:
        # Per-image path: native NCHW view (no transposes, no pad copy).
        tm = _pick_tm(HW, Cin, Cmid, Cout, in_isz, out_isz, vmem_budget, max_tm)
        xv = x_nchw.reshape(N, Cin, HW).astype(compute_dtype)
        grid = (N, pl.cdiv(HW, tm))
        x_spec = pl.BlockSpec((None, Cin, tm), lambda n, p: (n, 0, p))
        o_spec = pl.BlockSpec((None, Cout, tm), lambda n, p: (n, 0, p))
        wmap = lambda n, p: (0, 0)
        out_arr_shape = (N, Cout, HW)
        dim_sem = ("parallel", "parallel")

    def run(weight_mode):
        wspecs = []
        for shp in w_shapes:
            if weight_mode is None:
                wspecs.append(pl.BlockSpec(shp, wmap))
            else:
                wspecs.append(pl.BlockSpec(shp, wmap, pipeline_mode=weight_mode))
        return pl.pallas_call(
            functools.partial(_reslayer_kernel, skip),
            out_shape=jax.ShapeDtypeStruct(out_arr_shape, out_dtype),
            grid_spec=pltpu.PrefetchScalarGridSpec(
                num_scalar_prefetch=0,
                grid=grid,
                in_specs=[x_spec] + wspecs,
                out_specs=o_spec,
            ),
            compiler_params=pltpu.CompilerParams(
                dimension_semantics=dim_sem,
                vmem_limit_bytes=int(vmem_budget)),
            cost_estimate=pl.CostEstimate(flops=int(flops),
                                          transcendentals=0,
                                          bytes_accessed=int(bytes_accessed)),
        )(xv, w1f, b1f, w2f, b2f, w3f, b3f)

    try:
        # Invariant weight/bias blocks: single-buffer them to save VMEM.
        out_flat = run(pl.Buffered(1))
    except Exception:
        # Fallback if this pipeline mode is not supported by the installed Mosaic.
        out_flat = run(None)

    if use_flat:
        out = jnp.transpose(out_flat.reshape(Cout, N, HW), (1, 0, 2))
        return out.reshape(N, Cout, H, W)
    return out_flat.reshape(N, Cout, H, W)


# ---------------------------------------------------------------------------
# Plain-JAX reference + parameter construction
# ---------------------------------------------------------------------------
def _reference_forward(x_nchw, params, eps=1e-5):
    """Plain-JAX NCHW reference (same math, f32) for correctness checking."""
    N, Cin, H, W = x_nchw.shape

    def conv_bn(z, w, b, bn, relu=True):
        y = jnp.einsum("oc,nchw->nohw", w[:, :, 0, 0], z) + b[None, :, None, None]
        gamma, beta, mean, var = bn
        s = gamma * jax.lax.rsqrt(var + eps)
        t = beta - mean * s
        y = y * s[None, :, None, None] + t[None, :, None, None]
        return jnp.maximum(y, 0.0) if relu else y

    out = conv_bn(x_nchw, params["conv1"], params["bias1"], params["bn1"])
    out = conv_bn(out, params["conv2"], params["bias2"], params["bn2"])
    out = conv_bn(out, params["conv3"], params["bias3"], params["bn3"], relu=False)
    if Cin == params["conv3"].shape[0]:
        out = out + x_nchw
    return jnp.maximum(out, 0.0)


def make_params(key, inplanes, planes, expansion=4):
    """Deterministic parameter init matching ResLayer.__init__ shapes."""
    ks = jax.random.split(key, 6)
    cout3 = planes * expansion

    def bn_params(k, c):
        k1, k2, k3 = jax.random.split(k, 3)
        gamma = 1.0 + 0.1 * jax.random.normal(k1, (c,), jnp.float32)
        beta = 0.1 * jax.random.normal(k2, (c,), jnp.float32)
        mean = 0.1 * jax.random.normal(k3, (c,), jnp.float32)
        var = jnp.ones((c,), jnp.float32)
        return (gamma, beta, mean, var)

    params = {
        # conv1x1 init 'normal0.01': weight ~ N(0, 0.01), bias = 0
        "conv1": 0.01 * jax.random.normal(ks[0], (planes, inplanes, 1, 1), jnp.float32),
        "bias1": jnp.zeros((planes,), jnp.float32),
        "bn1": bn_params(ks[1], planes),
        "conv2": 0.01 * jax.random.normal(ks[2], (planes, planes, 1, 1), jnp.float32),
        "bias2": jnp.zeros((planes,), jnp.float32),
        "bn2": bn_params(ks[3], planes),
        "conv3": 0.01 * jax.random.normal(ks[4], (cout3, planes, 1, 1), jnp.float32),
        "bias3": jnp.zeros((cout3,), jnp.float32),
        "bn3": bn_params(ks[5], cout3),
    }
    return params


if __name__ == "__main__":
    key = jax.random.PRNGKey(0)
    kx1, kx2, kp1, kp2 = jax.random.split(key, 4)

    # Case 1: small feature map (HW < 128 -> lane-dense flat path), skip active.
    N, inplanes, H, W = 2, 16, 8, 8
    planes, expansion = 4, 4
    x1 = jax.random.normal(kx1, (N, inplanes, H, W), jnp.float32)
    p1 = make_params(kp1, inplanes, planes, expansion)
    ref1 = _reference_forward(x1, p1)

    out1_bf16 = jax.block_until_ready(reslayer_forward(x1, p1))   # bf16 default
    out1_f32 = jax.block_until_ready(
        reslayer_forward(x1, p1, compute_dtype=jnp.float32, out_dtype=jnp.float32))
    assert out1_bf16.shape == (N, planes * expansion, H, W)
    assert jnp.allclose(out1_bf16.astype(jnp.float32), ref1, atol=5e-2, rtol=5e-2), \
        "bf16 kernel mismatch vs reference (case 1)"
    assert jnp.allclose(out1_f32, ref1, atol=1e-5, rtol=1e-5), \
        "f32 kernel mismatch vs reference (case 1)"

    # Case 2: larger feature map (HW >= 128 -> per-image batched path).
    N2, H2, W2 = 2, 16, 16
    x2 = jax.random.normal(kx2, (N2, inplanes, H2, W2), jnp.float32)
    ref2 = _reference_forward(x2, p1)
    out2_bf16 = jax.block_until_ready(reslayer_forward(x2, p1))
    out2_f32 = jax.block_until_ready(
        reslayer_forward(x2, p1, compute_dtype=jnp.float32, out_dtype=jnp.float32))
    assert jnp.allclose(out2_bf16.astype(jnp.float32), ref2, atol=5e-2, rtol=5e-2), \
        "bf16 kernel mismatch vs reference (case 2)"
    assert jnp.allclose(out2_f32, ref2, atol=1e-5, rtol=1e-5), \
        "f32 kernel mismatch vs reference (case 2)"

    # Case 3: no-skip configuration (inplanes != planes * expansion).
    p3 = make_params(kp2, inplanes, 8, expansion)          # Cout = 32 != Cin = 16
    ref3 = _reference_forward(x1, p3)
    out3 = jax.block_until_ready(
        reslayer_forward(x1, p3, compute_dtype=jnp.float32, out_dtype=jnp.float32))
    assert out3.shape == (N, 8 * expansion, H, W)
    assert jnp.allclose(out3, ref3, atol=1e-5, rtol=1e-5), \
        "f32 kernel mismatch vs reference (case 3, no skip)"

    print("KERNEL_OK")
</pallas_src>

<mosaic_0001>
module attributes {stable_mosaic.version = 11 : i64} {
  func.func @_reslayer_kernel(%arg0: i32, %arg1: memref<16x128xbf16, #tpu.memory_space<vmem>>, %arg2: memref<4x16xbf16, #tpu.memory_space<vmem>>, %arg3: memref<4x1xf32, #tpu.memory_space<vmem>>, %arg4: memref<4x4xbf16, #tpu.memory_space<vmem>>, %arg5: memref<4x1xf32, #tpu.memory_space<vmem>>, %arg6: memref<16x4xbf16, #tpu.memory_space<vmem>>, %arg7: memref<16x1xf32, #tpu.memory_space<vmem>>, %arg8: memref<16x128xbf16, #tpu.memory_space<vmem>>) attributes {dimension_semantics = [#tpu.dimension_semantics<parallel>], iteration_bounds = array<i64: 1>, scalar_prefetch = 0 : i64, scratch_operands = 0 : i64, tpu.core_type = #tpu.core_type<tc>, window_params = [{transform_indices = @transform_0, window_bounds = array<i64: 16, 128>}, {pipeline_mode = #tpu.pipeline_mode<synchronous>, transform_indices = @transform_1, window_bounds = array<i64: 4, 16>}, {pipeline_mode = #tpu.pipeline_mode<synchronous>, transform_indices = @transform_2, window_bounds = array<i64: 4, 1>}, {pipeline_mode = #tpu.pipeline_mode<synchronous>, transform_indices = @transform_3, window_bounds = array<i64: 4, 4>}, {pipeline_mode = #tpu.pipeline_mode<synchronous>, transform_indices = @transform_4, window_bounds = array<i64: 4, 1>}, {pipeline_mode = #tpu.pipeline_mode<synchronous>, transform_indices = @transform_5, window_bounds = array<i64: 16, 4>}, {pipeline_mode = #tpu.pipeline_mode<synchronous>, transform_indices = @transform_6, window_bounds = array<i64: 16, 1>}, {transform_indices = @transform_7, window_bounds = array<i64: 16, 128>}]} {
    %c0 = arith.constant 0 : index
    %c0_0 = arith.constant 0 : index
    %0 = vector.load %arg1[%c0, %c0_0] : memref<16x128xbf16, #tpu.memory_space<vmem>>, vector<16x128xbf16>
    %c0_1 = arith.constant 0 : index
    %c0_2 = arith.constant 0 : index
    %1 = vector.load %arg2[%c0_1, %c0_2] : memref<4x16xbf16, #tpu.memory_space<vmem>>, vector<4x16xbf16>
    %cst = arith.constant dense<0.000000e+00> : vector<4x128xf32>
    %2 = tpu.matmul %1, %0, %cst {dimension_numbers = #tpu.dot_dimension_numbers<[1], [0], [0], [1], [0, 0, 1, 1], [], []>} : vector<4x16xbf16>, vector<16x128xbf16>, vector<4x128xf32> -> vector<4x128xf32>
    %c0_3 = arith.constant 0 : index
    %c0_4 = arith.constant 0 : index
    %3 = vector.load %arg3[%c0_3, %c0_4] : memref<4x1xf32, #tpu.memory_space<vmem>>, vector<4x1xf32>
    %4 = vector.broadcast %3 : vector<4x1xf32> to vector<4x128xf32>
    %5 = arith.addf %2, %4 : vector<4x128xf32>
    %cst_5 = arith.constant 0.000000e+00 : f32
    %6 = vector.broadcast %cst_5 : f32 to vector<4x128xf32>
    %7 = arith.maximumf %5, %6 : vector<4x128xf32>
    %c0_6 = arith.constant 0 : index
    %c0_7 = arith.constant 0 : index
    %8 = vector.load %arg4[%c0_6, %c0_7] : memref<4x4xbf16, #tpu.memory_space<vmem>>, vector<4x4xbf16>
    %9 = arith.truncf %7 : vector<4x128xf32> to vector<4x128xbf16>
    %cst_8 = arith.constant dense<0.000000e+00> : vector<4x128xf32>
    %10 = tpu.matmul %8, %9, %cst_8 {dimension_numbers = #tpu.dot_dimension_numbers<[1], [0], [0], [1], [0, 0, 1, 1], [], []>} : vector<4x4xbf16>, vector<4x128xbf16>, vector<4x128xf32> -> vector<4x128xf32>
    %c0_9 = arith.constant 0 : index
    %c0_10 = arith.constant 0 : index
    %11 = vector.load %arg5[%c0_9, %c0_10] : memref<4x1xf32, #tpu.memory_space<vmem>>, vector<4x1xf32>
    %12 = vector.broadcast %11 : vector<4x1xf32> to vector<4x128xf32>
    %13 = arith.addf %10, %12 : vector<4x128xf32>
    %cst_11 = arith.constant 0.000000e+00 : f32
    %14 = vector.broadcast %cst_11 : f32 to vector<4x128xf32>
    %15 = arith.maximumf %13, %14 : vector<4x128xf32>
    %c0_12 = arith.constant 0 : index
    %c0_13 = arith.constant 0 : index
    %16 = vector.load %arg6[%c0_12, %c0_13] : memref<16x4xbf16, #tpu.memory_space<vmem>>, vector<16x4xbf16>
    %17 = arith.truncf %15 : vector<4x128xf32> to vector<4x128xbf16>
    %cst_14 = arith.constant dense<0.000000e+00> : vector<16x128xf32>
    %18 = tpu.matmul %16, %17, %cst_14 {dimension_numbers = #tpu.dot_dimension_numbers<[1], [0], [0], [1], [0, 0, 1, 1], [], []>} : vector<16x4xbf16>, vector<4x128xbf16>, vector<16x128xf32> -> vector<16x128xf32>
    %c0_15 = arith.constant 0 : index
    %c0_16 = arith.constant 0 : index
    %19 = vector.load %arg7[%c0_15, %c0_16] : memref<16x1xf32, #tpu.memory_space<vmem>>, vector<16x1xf32>
    %20 = vector.broadcast %19 : vector<16x1xf32> to vector<16x128xf32>
    %21 = arith.addf %18, %20 : vector<16x128xf32>
    %22 = arith.extf %0 : vector<16x128xbf16> to vector<16x128xf32>
    %23 = arith.addf %21, %22 : vector<16x128xf32>
    %cst_17 = arith.constant 0.000000e+00 : f32
    %24 = vector.broadcast %cst_17 : f32 to vector<16x128xf32>
    %25 = arith.maximumf %23, %24 : vector<16x128xf32>
    %26 = arith.truncf %25 : vector<16x128xf32> to vector<16x128xbf16>
    %c0_18 = arith.constant 0 : index
    %c0_19 = arith.constant 0 : index
    %27 = vector.load %arg8[%c0_18, %c0_19] : memref<16x128xbf16, #tpu.memory_space<vmem>>, vector<16x128xbf16>
    tpu.vector_store %arg8[%c0_18, %c0_19], %26 {strides = array<i32>} : memref<16x128xbf16, #tpu.memory_space<vmem>>, vector<16x128xbf16>,
    return
  }
  func.func @transform_0(%arg0: i32) -> (i32, i32) {
    %c0_i32 = arith.constant 0 : i32
    %c0_i32_0 = arith.constant 0 : i32
    return %c0_i32, %arg0 : i32, i32
  }
  func.func @transform_1(%arg0: i32) -> (i32, i32) {
    %c0_i32 = arith.constant 0 : i32
    %c0_i32_0 = arith.constant 0 : i32
    %c0_i32_1 = arith.constant 0 : i32
    return %c0_i32, %c0_i32_0 : i32, i32
  }
  func.func @transform_2(%arg0: i32) -> (i32, i32) {
    %c0_i32 = arith.constant 0 : i32
    %c0_i32_0 = arith.constant 0 : i32
    %c0_i32_1 = arith.constant 0 : i32
    return %c0_i32, %c0_i32_0 : i32, i32
  }
  func.func @transform_3(%arg0: i32) -> (i32, i32) {
    %c0_i32 = arith.constant 0 : i32
    %c0_i32_0 = arith.constant 0 : i32
    %c0_i32_1 = arith.constant 0 : i32
    return %c0_i32, %c0_i32_0 : i32, i32
  }
  func.func @transform_4(%arg0: i32) -> (i32, i32) {
    %c0_i32 = arith.constant 0 : i32
    %c0_i32_0 = arith.constant 0 : i32
    %c0_i32_1 = arith.constant 0 : i32
    return %c0_i32, %c0_i32_0 : i32, i32
  }
  func.func @transform_5(%arg0: i32) -> (i32, i32) {
    %c0_i32 = arith.constant 0 : i32
    %c0_i32_0 = arith.constant 0 : i32
    %c0_i32_1 = arith.constant 0 : i32
    return %c0_i32, %c0_i32_0 : i32, i32
  }
  func.func @transform_6(%arg0: i32) -> (i32, i32) {
    %c0_i32 = arith.constant 0 : i32
    %c0_i32_0 = arith.constant 0 : i32
    %c0_i32_1 = arith.constant 0 : i32
    return %c0_i32, %c0_i32_0 : i32, i32
  }
  func.func @transform_7(%arg0: i32) -> (i32, i32) {
    %c0_i32 = arith.constant 0 : i32
    %c0_i32_0 = arith.constant 0 : i32
    return %c0_i32, %arg0 : i32, i32
  }
}

module attributes {stable_mosaic.version = 11 : i64} {
  func.func @_reslayer_kernel(%arg0: i32, %arg1: memref<16x128xbf16, #tpu.memory_space<vmem>>, %arg2: memref<4x16xbf16, #tpu.memory_space<vmem>>, %arg3: memref<4x1xf32, #tpu.memory_space<vmem>>, %arg4: memref<4x4xbf16, #tpu.memory_space<vmem>>, %arg5: memref<4x1xf32, #tpu.memory_space<vmem>>, %arg6: memref<16x4xbf16, #tpu.memory_space<vmem>>, %arg7: memref<16x1xf32, #tpu.memory_space<vmem>>, %arg8: memref<16x128xbf16, #tpu.memory_space<vmem>>) attributes {dimension_semantics = [#tpu.dimension_semantics<parallel>], iteration_bounds = array<i64: 1>, scalar_prefetch = 0 : i64, scratch_operands = 0 : i64, tpu.core_type = #tpu.core_type<tc>, window_params = [{transform_indices = @transform_0, window_bounds = array<i64: 16, 128>}, {pipeline_mode = #tpu.pipeline_mode<synchronous>, transform_indices = @transform_1, window_bounds = array<i64: 4, 16>}, {pipeline_mode = #tpu.pipeline_mode<synchronous>, transform_indices = @transform_2, window_bounds = array<i64: 4, 1>}, {pipeline_mode = #tpu.pipeline_mode<synchronous>, transform_indices = @transform_3, window_bounds = array<i64: 4, 4>}, {pipeline_mode = #tpu.pipeline_mode<synchronous>, transform_indices = @transform_4, window_bounds = array<i64: 4, 1>}, {pipeline_mode = #tpu.pipeline_mode<synchronous>, transform_indices = @transform_5, window_bounds = array<i64: 16, 4>}, {pipeline_mode = #tpu.pipeline_mode<synchronous>, transform_indices = @transform_6, window_bounds = array<i64: 16, 1>}, {transform_indices = @transform_7, window_bounds = array<i64: 16, 128>}]} {
    %c0 = arith.constant 0 : index
    %c0_0 = arith.constant 0 : index
    %0 = vector.load %arg1[%c0, %c0_0] : memref<16x128xbf16, #tpu.memory_space<vmem>>, vector<16x128xbf16>
    %c0_1 = arith.constant 0 : index
    %c0_2 = arith.constant 0 : index
    %1 = vector.load %arg2[%c0_1, %c0_2] : memref<4x16xbf16, #tpu.memory_space<vmem>>, vector<4x16xbf16>
    %cst = arith.constant dense<0.000000e+00> : vector<4x128xf32>
    %2 = tpu.matmul %1, %0, %cst {dimension_numbers = #tpu.dot_dimension_numbers<[1], [0], [0], [1], [0, 0, 1, 1], [], []>} : vector<4x16xbf16>, vector<16x128xbf16>, vector<4x128xf32> -> vector<4x128xf32>
    %c0_3 = arith.constant 0 : index
    %c0_4 = arith.constant 0 : index
    %3 = vector.load %arg3[%c0_3, %c0_4] : memref<4x1xf32, #tpu.memory_space<vmem>>, vector<4x1xf32>
    %4 = vector.broadcast %3 : vector<4x1xf32> to vector<4x128xf32>
    %5 = arith.addf %2, %4 : vector<4x128xf32>
    %cst_5 = arith.constant 0.000000e+00 : f32
    %6 = vector.broadcast %cst_5 : f32 to vector<4x128xf32>
    %7 = arith.maximumf %5, %6 : vector<4x128xf32>
    %c0_6 = arith.constant 0 : index
    %c0_7 = arith.constant 0 : index
    %8 = vector.load %arg4[%c0_6, %c0_7] : memref<4x4xbf16, #tpu.memory_space<vmem>>, vector<4x4xbf16>
    %9 = arith.truncf %7 : vector<4x128xf32> to vector<4x128xbf16>
    %cst_8 = arith.constant dense<0.000000e+00> : vector<4x128xf32>
    %10 = tpu.matmul %8, %9, %cst_8 {dimension_numbers = #tpu.dot_dimension_numbers<[1], [0], [0], [1], [0, 0, 1, 1], [], []>} : vector<4x4xbf16>, vector<4x128xbf16>, vector<4x128xf32> -> vector<4x128xf32>
    %c0_9 = arith.constant 0 : index
    %c0_10 = arith.constant 0 : index
    %11 = vector.load %arg5[%c0_9, %c0_10] : memref<4x1xf32, #tpu.memory_space<vmem>>, vector<4x1xf32>
    %12 = vector.broadcast %11 : vector<4x1xf32> to vector<4x128xf32>
    %13 = arith.addf %10, %12 : vector<4x128xf32>
    %cst_11 = arith.constant 0.000000e+00 : f32
    %14 = vector.broadcast %cst_11 : f32 to vector<4x128xf32>
    %15 = arith.maximumf %13, %14 : vector<4x128xf32>
    %c0_12 = arith.constant 0 : index
    %c0_13 = arith.constant 0 : index
    %16 = vector.load %arg6[%c0_12, %c0_13] : memref<16x4xbf16, #tpu.memory_space<vmem>>, vector<16x4xbf16>
    %17 = arith.truncf %15 : vector<4x128xf32> to vector<4x128xbf16>
    %cst_14 = arith.constant dense<0.000000e+00> : vector<16x128xf32>
    %18 = tpu.matmul %16, %17, %cst_14 {dimension_numbers = #tpu.dot_dimension_numbers<[1], [0], [0], [1], [0, 0, 1, 1], [], []>} : vector<16x4xbf16>, vector<4x128xbf16>, vector<16x128xf32> -> vector<16x128xf32>
    %c0_15 = arith.constant 0 : index
    %c0_16 = arith.constant 0 : index
    %19 = vector.load %arg7[%c0_15, %c0_16] : memref<16x1xf32, #tpu.memory_space<vmem>>, vector<16x1xf32>
    %20 = vector.broadcast %19 : vector<16x1xf32> to vector<16x128xf32>
    %21 = arith.addf %18, %20 : vector<16x128xf32>
    %22 = arith.extf %0 : vector<16x128xbf16> to vector<16x128xf32>
    %23 = arith.addf %21, %22 : vector<16x128xf32>
    %cst_17 = arith.constant 0.000000e+00 : f32
    %24 = vector.broadcast %cst_17 : f32 to vector<16x128xf32>
    %25 = arith.maximumf %23, %24 : vector<16x128xf32>
    %26 = arith.truncf %25 : vector<16x128xf32> to vector<16x128xbf16>
    %c0_18 = arith.constant 0 : index
    %c0_19 = arith.constant 0 : index
    %27 = vector.load %arg8[%c0_18, %c0_19] : memref<16x128xbf16, #tpu.memory_space<vmem>>, vector<16x128xbf16>
    tpu.vector_store %arg8[%c0_18, %c0_19], %26 {strides = array<i32>} : memref<16x128xbf16, #tpu.memory_space<vmem>>, vector<16x128xbf16>,
    return
  }
  func.func @transform_0(%arg0: i32) -> (i32, i32) {
    %c0_i32 = arith.constant 0 : i32
    %c0_i32_0 = arith.constant 0 : i32
    return %c0_i32, %arg0 : i32, i32
  }
  func.func @transform_1(%arg0: i32) -> (i32, i32) {
    %c0_i32 = arith.constant 0 : i32
    %c0_i32_0 = arith.constant 0 : i32
    %c0_i32_1 = arith.constant 0 : i32
    return %c0_i32, %c0_i32_0 : i32, i32
  }
  func.func @transform_2(%arg0: i32) -> (i32, i32) {
    %c0_i32 = arith.constant 0 : i32
    %c0_i32_0 = arith.constant 0 : i32
    %c0_i32_1 = arith.constant 0 : i32
    return %c0_i32, %c0_i32_0 : i32, i32
  }
  func.func @transform_3(%arg0: i32) -> (i32, i32) {
    %c0_i32 = arith.constant 0 : i32
    %c0_i32_0 = arith.constant 0 : i32
    %c0_i32_1 = arith.constant 0 : i32
    return %c0_i32, %c0_i32_0 : i32, i32
  }
  func.func @transform_4(%arg0: i32) -> (i32, i32) {
    %c0_i32 = arith.constant 0 : i32
    %c0_i32_0 = arith.constant 0 : i32
    %c0_i32_1 = arith.constant 0 : i32
    return %c0_i32, %c0_i32_0 : i32, i32
  }
  func.func @transform_5(%arg0: i32) -> (i32, i32) {
    %c0_i32 = arith.constant 0 : i32
    %c0_i32_0 = arith.constant 0 : i32
    %c0_i32_1 = arith.constant 0 : i32
    return %c0_i32, %c0_i32_0 : i32, i32
  }
  func.func @transform_6(%arg0: i32) -> (i32, i32) {
    %c0_i32 = arith.constant 0 : i32
    %c0_i32_0 = arith.constant 0 : i32
    %c0_i32_1 = arith.constant 0 : i32
    return %c0_i32, %c0_i32_0 : i32, i32
  }
  func.func @transform_7(%arg0: i32) -> (i32, i32) {
    %c0_i32 = arith.constant 0 : i32
    %c0_i32_0 = arith.constant 0 : i32
    return %c0_i32, %arg0 : i32, i32
  }
}

</mosaic_0001>

<llo_original>
// kernel: tpu_custom_call.1
$region0: #{tpu_custom_call.1}
  #allocation0 [shape = 'u32[]', space=smem, size = 0x4, offset = 0x4, fixed_abs, tag = 'smem constant byte address 0x4 - core index']
  #allocation1 [shape = 'u32[144,128]{1,0:T(1,128)}', space=vmem, size = 0x12000, scoped, tag = 'internal scratch']
  %s0 = inlined_call_operand.vmem [shape: bf16[16,128], index: 0, kind: input, shape index: {}]
  %s1 = inlined_call_operand.vmem [shape: bf16[4,16], index: 1, kind: input, shape index: {}]
  %s2 = inlined_call_operand.vmem [shape: f32[4,1], index: 2, kind: input, shape index: {}]
  %s3 = inlined_call_operand.vmem [shape: bf16[4,4], index: 3, kind: input, shape index: {}]
  %s4 = inlined_call_operand.vmem [shape: f32[4,1], index: 4, kind: input, shape index: {}]
  %s5 = inlined_call_operand.vmem [shape: bf16[16,4], index: 5, kind: input, shape index: {}]
  %s6 = inlined_call_operand.vmem [shape: f32[16,1], index: 6, kind: input, shape index: {}]
  %s7 = inlined_call_operand.hbm [shape: bf16[16,128], index: 7, kind: output, shape index: {}]
  %s8 = sld [smem:[#allocation0]]
  $region38: #{tpu_custom_call.1} parent=0
    _
  %s10 = ssub.s32 1, %s8
  %s11 = scalar_select 0, %s10, %s8
  $region1: #{tpu_custom_call.1} parent=0
    #allocation2 [shape = 'u8[4096]{0}', space=vmem, size = 0x1000, scoped, tag = 'output window, operand 0, single buffered']
    #allocation3 [shape = 's32[1]{0}', space=sflag, size = 0x4, scoped, tag = 'scoped memory for tpu_custom_call.1']
    %12 = vsyncpa [#allocation3], 0
    // Predicated region
    $region2: #{tpu_custom_call.1} parent=1 // pred_check
      _
    $region3: #{tpu_custom_call.1} parent=1 // pred_check_branch
      %14 = sbr.rel (0) target = $region5
    $region4: #{tpu_custom_call.1} parent=1 // pred_region
      _
    $region5: #{tpu_custom_call.1} parent=1 // pred_fallthru
      _
    // Predicated region
    $region6: #{tpu_custom_call.1} parent=1 // pred_check
      _
    $region7: #{tpu_custom_call.1} parent=1 // pred_check_branch
      %16 = sbr.rel (0) target = $region9
    $region8: #{tpu_custom_call.1} parent=1 // pred_region
      _
    $region9: #{tpu_custom_call.1} parent=1 // pred_fallthru
      _
    // Predicated region
    $region10: #{tpu_custom_call.1} parent=1 // pred_check
      _
    $region11: #{tpu_custom_call.1} parent=1 // pred_check_branch
      %18 = sbr.rel (0) target = $region13
    $region12: #{tpu_custom_call.1} parent=1 // pred_region
      _
    $region13: #{tpu_custom_call.1} parent=1 // pred_fallthru
      _
    // Predicated region
    $region14: #{tpu_custom_call.1} parent=1 // pred_check
      _
    $region15: #{tpu_custom_call.1} parent=1 // pred_check_branch
      %20 = sbr.rel (0) target = $region17
    $region16: #{tpu_custom_call.1} parent=1 // pred_region
      _
    $region17: #{tpu_custom_call.1} parent=1 // pred_fallthru
      _
    // Predicated region
    $region18: #{tpu_custom_call.1} parent=1 // pred_check
      _
    $region19: #{tpu_custom_call.1} parent=1 // pred_check_branch
      %22 = sbr.rel (0) target = $region21
    $region20: #{tpu_custom_call.1} parent=1 // pred_region
      _
    $region21: #{tpu_custom_call.1} parent=1 // pred_fallthru
      _
    // Predicated region
    $region22: #{tpu_custom_call.1} parent=1 // pred_check
      _
    $region23: #{tpu_custom_call.1} parent=1 // pred_check_branch
      %24 = sbr.rel (0) target = $region25
    $region24: #{tpu_custom_call.1} parent=1 // pred_region
      _
    $region25: #{tpu_custom_call.1} parent=1 // pred_fallthru
      _
    // Predicated region
    $region26: #{tpu_custom_call.1} parent=1 // pred_check
      _
    $region27: #{tpu_custom_call.1} parent=1 // pred_check_branch
      %26 = sbr.rel (0) target = $region29
    $region28: #{tpu_custom_call.1} parent=1 // pred_region
      _
    $region29: #{tpu_custom_call.1} parent=1 // pred_fallthru
      _
    %v28 = vld [vmem:[%s0] sm:$0xf]
    %v29 = vld [vmem:[%s0 + $0x4] sm:$0xf]
    %v30 = vld [vmem:[%s1] sm:$0x3]
    %v31 = vld [vmem:[%s2] sm:$0xf]
    %33 = vset.pattern.permute.xlu0 0
    %34 = vperm.xlu0 %33, %v31
    %v35 = vpop.permute.xlu0 %34
    %v39 = vunpack.c.l.b16 %v28
    %v40 = vunpack.c.l.b16 %v29
    %v41 = vpack.c.b16 %v40, %v39
    %vm43 = vcmask 130048
    %v45 = vsel %vm43, %v30, 0
    %47 = vmatprep.subr.bf16.mxu0 0
    %48 = vmatpush1.bf16.msra.mxu0 %v41
    %49 = vmatprep.subr.bf16.mxu0 0
    %50 = vmatpush1.bf16.msra.mxu0 0
    %51 = vmatprep.subr.bf16.mxu0 0
    %52 = vmatpush1.bf16.msra.mxu0 0
    %53 = vmatprep.subr.bf16.mxu0 0
    %54 = vmatpush1.bf16.msra.mxu0 0
    %55 = vmatprep.subr.bf16.mxu0 0
    %56 = vmatpush1.bf16.msra.mxu0 0
    %57 = vmatprep.subr.bf16.mxu0 0
    %58 = vmatpush1.bf16.msra.mxu0 0
    %59 = vmatprep.subr.bf16.mxu0 0
    %60 = vmatpush1.bf16.msra.mxu0 0
    %61 = vmatprep.subr.bf16.mxu0 0
    %62 = vmatpush1.bf16.msra.mxu0 0
    %63 = vmatprep.subr.bf16.mxu0 0
    %64 = vmatpush1.bf16.msra.mxu0 0
    %65 = vmatprep.subr.bf16.mxu0 0
    %66 = vmatpush1.bf16.msra.mxu0 0
    %67 = vmatprep.subr.bf16.mxu0 0
    %68 = vmatpush1.bf16.msra.mxu0 0
    %69 = vmatprep.subr.bf16.mxu0 0
    %70 = vmatpush1.bf16.msra.mxu0 0
    %71 = vmatprep.subr.bf16.mxu0 0
    %72 = vmatpush1.bf16.msra.mxu0 0
    %73 = vmatprep.subr.bf16.mxu0 0
    %74 = vmatpush1.bf16.msra.mxu0 0
    %75 = vmatprep.subr.bf16.mxu0 0
    %76 = vmatpush1.bf16.msra.mxu0 0
    %77 = vmatprep.subr.bf16.mxu0 0
    %78 = vmatpush1.bf16.msra.mxu0 0
    %79 = vmatprep.mubr.bf16.mxu0 0
    %80 = vmatmul.mubr.bf16.gmra.mrb[0].mxu0 %v45
    %v81 = vpop.f32.mrb[0].mxu0
    %v82 = vadd.f32 %v35, %v81
    %v83 = vpop.f32.mrb[0].mxu0
    %v84 = vpop.f32.mrb[0].mxu0
    %v85 = vpop.f32.mrb[0].mxu0
    %86 = vdwg.mxu0
    %v87 = vmax.f32 %v82, 0.0
    %v88 = vld [vmem:[%s3] sm:$0x3]
    %v89 = vpack.c.bf16 %v87, %v87
    %v90 = vld [vmem:[%s4] sm:$0xf]
    %92 = vset.pattern.permute.xlu0 0
    %93 = vperm.xlu0 %92, %v90
    %v94 = vpop.permute.xlu0 %93
    %vm96 = vcmask 31744
    %v98 = vsel %vm96, %v88, 0
    %vm100 = vcmask 1041408
    %v102 = vsel %vm100, %v89, 0
    %104 = vmatprep.subr.bf16.mxu0 0
    %105 = vmatpush1.bf16.msra.mxu0 %v102
    %106 = vmatprep.subr.bf16.mxu0 0
    %107 = vmatpush1.bf16.msra.mxu0 0
    %108 = vmatprep.subr.bf16.mxu0 0
    %109 = vmatpush1.bf16.msra.mxu0 0
    %110 = vmatprep.subr.bf16.mxu0 0
    %111 = vmatpush1.bf16.msra.mxu0 0
    %112 = vmatprep.subr.bf16.mxu0 0
    %113 = vmatpush1.bf16.msra.mxu0 0
    %114 = vmatprep.subr.bf16.mxu0 0
    %115 = vmatpush1.bf16.msra.mxu0 0
    %116 = vmatprep.subr.bf16.mxu0 0
    %117 = vmatpush1.bf16.msra.mxu0 0
    %118 = vmatprep.subr.bf16.mxu0 0
    %119 = vmatpush1.bf16.msra.mxu0 0
    %120 = vmatprep.subr.bf16.mxu0 0
    %121 = vmatpush1.bf16.msra.mxu0 0
    %122 = vmatprep.subr.bf16.mxu0 0
    %123 = vmatpush1.bf16.msra.mxu0 0
    %124 = vmatprep.subr.bf16.mxu0 0
    %125 = vmatpush1.bf16.msra.mxu0 0
    %126 = vmatprep.subr.bf16.mxu0 0
    %127 = vmatpush1.bf16.msra.mxu0 0
    %128 = vmatprep.subr.bf16.mxu0 0
    %129 = vmatpush1.bf16.msra.mxu0 0
    %130 = vmatprep.subr.bf16.mxu0 0
    %131 = vmatpush1.bf16.msra.mxu0 0
    %132 = vmatprep.subr.bf16.mxu0 0
    %133 = vmatpush1.bf16.msra.mxu0 0
    %134 = vmatprep.subr.bf16.mxu0 0
    %135 = vmatpush1.bf16.msra.mxu0 0
    %136 = vmatprep.mubr.bf16.mxu0 0
    %137 = vmatmul.mubr.bf16.gmra.mrb[0].mxu0 %v98
    %v138 = vpop.f32.mrb[0].mxu0
    %v139 = vadd.f32 %v94, %v138
    %v140 = vpop.f32.mrb[0].mxu0
    %v141 = vpop.f32.mrb[0].mxu0
    %v142 = vpop.f32.mrb[0].mxu0
    %143 = vdwg.mxu0
    %v144 = vmax.f32 %v139, 0.0
    %v145 = vld [vmem:[%s5] sm:$0xf]
    %v146 = vld [vmem:[%s5 + $0x4] sm:$0xf]
    %v147 = vpack.c.bf16 %v144, %v144
    %v148 = vld [vmem:[%s6] sm:$0xff]
    %v149 = vld [vmem:[%s6 + $0x8] sm:$0xff]
    %151 = vset.pattern.permute.xlu0 0
    %152 = vperm.xlu0 %151, %v148
    %v153 = vpop.permute.xlu0 %152
    %156 = vset.pattern.permute.xlu0 0
    %157 = vperm.xlu0 %156, %v149
    %v158 = vpop.permute.xlu0 %157
    %v162 = vunpack.c.l.b16 %v145
    %v163 = vunpack.c.l.b16 %v146
    %v164 = vpack.c.b16 %v163, %v162
    %v166 = vsel %vm96, %v164, 0
    %v169 = vsel %vm100, %v147, 0
    %171 = vmatprep.subr.bf16.mxu0 0
    %172 = vmatpush1.bf16.msra.mxu0 %v169
    %173 = vmatprep.subr.bf16.mxu0 0
    %174 = vmatpush1.bf16.msra.mxu0 0
    %175 = vmatprep.subr.bf16.mxu0 0
    %176 = vmatpush1.bf16.msra.mxu0 0
    %177 = vmatprep.subr.bf16.mxu0 0
    %178 = vmatpush1.bf16.msra.mxu0 0
    %179 = vmatprep.subr.bf16.mxu0 0
    %180 = vmatpush1.bf16.msra.mxu0 0
    %181 = vmatprep.subr.bf16.mxu0 0
    %182 = vmatpush1.bf16.msra.mxu0 0
    %183 = vmatprep.subr.bf16.mxu0 0
    %184 = vmatpush1.bf16.msra.mxu0 0
    %185 = vmatprep.subr.bf16.mxu0 0
    %186 = vmatpush1.bf16.msra.mxu0 0
    %187 = vmatprep.subr.bf16.mxu0 0
    %188 = vmatpush1.bf16.msra.mxu0 0
    %189 = vmatprep.subr.bf16.mxu0 0
    %190 = vmatpush1.bf16.msra.mxu0 0
    %191 = vmatprep.subr.bf16.mxu0 0
    %192 = vmatpush1.bf16.msra.mxu0 0
    %193 = vmatprep.subr.bf16.mxu0 0
    %194 = vmatpush1.bf16.msra.mxu0 0
    %195 = vmatprep.subr.bf16.mxu0 0
    %196 = vmatpush1.bf16.msra.mxu0 0
    %197 = vmatprep.subr.bf16.mxu0 0
    %198 = vmatpush1.bf16.msra.mxu0 0
    %199 = vmatprep.subr.bf16.mxu0 0
    %200 = vmatpush1.bf16.msra.mxu0 0
    %201 = vmatprep.subr.bf16.mxu0 0
    %202 = vmatpush1.bf16.msra.mxu0 0
    %203 = vmatprep.mubr.bf16.mxu0 0
    %204 = vmatmul.mubr.bf16.gmra.mrb[0].mxu0 %v166
    %v205 = vpop.f32.mrb[0].mxu0
    %v206 = vadd.f32 %v153, %v205
    %v207 = vpop.f32.mrb[0].mxu0
    %v208 = vpop.f32.mrb[0].mxu0
    %v209 = vadd.f32 %v158, %v208
    %v210 = vpop.f32.mrb[0].mxu0
    %211 = vdwg.mxu0
    %v212 = vunpack.c.l.bf16 %v28
    %v213 = vunpack.c.l.bf16 %v29
    %v214 = vadd.f32 %v206, %v212
    %v215 = vadd.f32 %v209, %v213
    %v216 = vmax.f32 %v214, 0.0
    %v217 = vmax.f32 %v215, 0.0
    %v218 = vpack.c.bf16 %v217, %v216
    %v220 = vunpack.c.l.b16 %v218
    %v221 = vunpack.c.h.b16 %v218
    %v222 = vpack.c.b16 %v220, %v220
    %v223 = vpack.c.b16 %v221, %v221
    %226 = vst [vmem:[#allocation2] sm:$0xf] %v222
    %227 = vst [vmem:[#allocation2 + $0x4] sm:$0xf] %v223
    // Predicated region
    $region30: #{tpu_custom_call.1} parent=1 // pred_check
      _
    $region31: #{tpu_custom_call.1} parent=1 // pred_check_branch
      %229 = sbr.rel (0) target = $region33
    $region32: #{tpu_custom_call.1} parent=1 // pred_region
      %s231 = ssub.s32 128, 128
      %232 = vsyncadd [#allocation3], %s231
      %s233 = sshll.u32 [#allocation2], 4
      %s234 = int_to_ptr.vmem [resolvable:$true] %s233
      %239 = dma.vmem_to_hbm [thread:$0]  %s234, 128, %s7, [#allocation3], 64, 64, 4
    $region33: #{tpu_custom_call.1} parent=1 // pred_fallthru
      _
    // Predicated region
    $region34: #{tpu_custom_call.1} parent=1 // pred_check
      _
    $region35: #{tpu_custom_call.1} parent=1 // pred_check_branch
      %241 = sbr.rel (0) target = $region37
    $region36: #{tpu_custom_call.1} parent=1 // pred_region
      %242 = dma.done [#allocation3], 128
    $region37: #{tpu_custom_call.1} parent=1 // pred_fallthru
      _
    %243 = vsyncpa [#allocation3], 1

// kernel: tpu_custom_call.1
$region0: #{tpu_custom_call.1}
  #allocation0 [shape = 'u32[]', space=smem, size = 0x4, offset = 0x4, fixed_abs, tag = 'smem constant byte address 0x4 - core index']
  #allocation1 [shape = 'u32[144,128]{1,0:T(1,128)}', space=vmem, size = 0x12000, scoped, tag = 'internal scratch']
  %s0 = inlined_call_operand.vmem [shape: bf16[16,128], index: 0, kind: input, shape index: {}]
  %s1 = inlined_call_operand.vmem [shape: bf16[4,16], index: 1, kind: input, shape index: {}]
  %s2 = inlined_call_operand.vmem [shape: f32[4,1], index: 2, kind: input, shape index: {}]
  %s3 = inlined_call_operand.vmem [shape: bf16[4,4], index: 3, kind: input, shape index: {}]
  %s4 = inlined_call_operand.vmem [shape: f32[4,1], index: 4, kind: input, shape index: {}]
  %s5 = inlined_call_operand.vmem [shape: bf16[16,4], index: 5, kind: input, shape index: {}]
  %s6 = inlined_call_operand.vmem [shape: f32[16,1], index: 6, kind: input, shape index: {}]
  %s7 = inlined_call_operand.hbm [shape: bf16[16,128], index: 7, kind: output, shape index: {}]
  %s8 = sld [smem:[#allocation0]]
  $region38: #{tpu_custom_call.1} parent=0
    _
  %s10 = ssub.s32 1, %s8
  %s11 = scalar_select 0, %s10, %s8
  $region1: #{tpu_custom_call.1} parent=0
    #allocation2 [shape = 'u8[4096]{0}', space=vmem, size = 0x1000, scoped, tag = 'output window, operand 0, single buffered']
    #allocation3 [shape = 's32[1]{0}', space=sflag, size = 0x4, scoped, tag = 'scoped memory for tpu_custom_call.1']
    %12 = vsyncpa [#allocation3], 0
    // Predicated region
    $region2: #{tpu_custom_call.1} parent=1 // pred_check
      _
    $region3: #{tpu_custom_call.1} parent=1 // pred_check_branch
      %14 = sbr.rel (0) target = $region5
    $region4: #{tpu_custom_call.1} parent=1 // pred_region
      _
    $region5: #{tpu_custom_call.1} parent=1 // pred_fallthru
      _
    // Predicated region
    $region6: #{tpu_custom_call.1} parent=1 // pred_check
      _
    $region7: #{tpu_custom_call.1} parent=1 // pred_check_branch
      %16 = sbr.rel (0) target = $region9
    $region8: #{tpu_custom_call.1} parent=1 // pred_region
      _
    $region9: #{tpu_custom_call.1} parent=1 // pred_fallthru
      _
    // Predicated region
    $region10: #{tpu_custom_call.1} parent=1 // pred_check
      _
    $region11: #{tpu_custom_call.1} parent=1 // pred_check_branch
      %18 = sbr.rel (0) target = $region13
    $region12: #{tpu_custom_call.1} parent=1 // pred_region
      _
    $region13: #{tpu_custom_call.1} parent=1 // pred_fallthru
      _
    // Predicated region
    $region14: #{tpu_custom_call.1} parent=1 // pred_check
      _
    $region15: #{tpu_custom_call.1} parent=1 // pred_check_branch
      %20 = sbr.rel (0) target = $region17
    $region16: #{tpu_custom_call.1} parent=1 // pred_region
      _
    $region17: #{tpu_custom_call.1} parent=1 // pred_fallthru
      _
    // Predicated region
    $region18: #{tpu_custom_call.1} parent=1 // pred_check
      _
    $region19: #{tpu_custom_call.1} parent=1 // pred_check_branch
      %22 = sbr.rel (0) target = $region21
    $region20: #{tpu_custom_call.1} parent=1 // pred_region
      _
    $region21: #{tpu_custom_call.1} parent=1 // pred_fallthru
      _
    // Predicated region
    $region22: #{tpu_custom_call.1} parent=1 // pred_check
      _
    $region23: #{tpu_custom_call.1} parent=1 // pred_check_branch
      %24 = sbr.rel (0) target = $region25
    $region24: #{tpu_custom_call.1} parent=1 // pred_region
      _
    $region25: #{tpu_custom_call.1} parent=1 // pred_fallthru
      _
    // Predicated region
    $region26: #{tpu_custom_call.1} parent=1 // pred_check
      _
    $region27: #{tpu_custom_call.1} parent=1 // pred_check_branch
      %26 = sbr.rel (0) target = $region29
    $region28: #{tpu_custom_call.1} parent=1 // pred_region
      _
    $region29: #{tpu_custom_call.1} parent=1 // pred_fallthru
      _
    %v28 = vld [vmem:[%s0] sm:$0xf]
    %v29 = vld [vmem:[%s0 + $0x4] sm:$0xf]
    %v30 = vld [vmem:[%s1] sm:$0x3]
    %v31 = vld [vmem:[%s2] sm:$0xf]
    %33 = vset.pattern.permute.xlu0 0
    %34 = vperm.xlu0 %33, %v31
    %v35 = vpop.permute.xlu0 %34
    %v39 = vunpack.c.l.b16 %v28
    %v40 = vunpack.c.l.b16 %v29
    %v41 = vpack.c.b16 %v40, %v39
    %vm43 = vcmask 130048
    %v45 = vsel %vm43, %v30, 0
    %47 = vmatprep.subr.bf16.mxu0 0
    %48 = vmatpush1.bf16.msra.mxu0 %v41
    %49 = vmatprep.subr.bf16.mxu0 0
    %50 = vmatpush1.bf16.msra.mxu0 0
    %51 = vmatprep.subr.bf16.mxu0 0
    %52 = vmatpush1.bf16.msra.mxu0 0
    %53 = vmatprep.subr.bf16.mxu0 0
    %54 = vmatpush1.bf16.msra.mxu0 0
    %55 = vmatprep.subr.bf16.mxu0 0
    %56 = vmatpush1.bf16.msra.mxu0 0
    %57 = vmatprep.subr.bf16.mxu0 0
    %58 = vmatpush1.bf16.msra.mxu0 0
    %59 = vmatprep.subr.bf16.mxu0 0
    %60 = vmatpush1.bf16.msra.mxu0 0
    %61 = vmatprep.subr.bf16.mxu0 0
    %62 = vmatpush1.bf16.msra.mxu0 0
    %63 = vmatprep.subr.bf16.mxu0 0
    %64 = vmatpush1.bf16.msra.mxu0 0
    %65 = vmatprep.subr.bf16.mxu0 0
    %66 = vmatpush1.bf16.msra.mxu0 0
    %67 = vmatprep.subr.bf16.mxu0 0
    %68 = vmatpush1.bf16.msra.mxu0 0
    %69 = vmatprep.subr.bf16.mxu0 0
    %70 = vmatpush1.bf16.msra.mxu0 0
    %71 = vmatprep.subr.bf16.mxu0 0
    %72 = vmatpush1.bf16.msra.mxu0 0
    %73 = vmatprep.subr.bf16.mxu0 0
    %74 = vmatpush1.bf16.msra.mxu0 0
    %75 = vmatprep.subr.bf16.mxu0 0
    %76 = vmatpush1.bf16.msra.mxu0 0
    %77 = vmatprep.subr.bf16.mxu0 0
    %78 = vmatpush1.bf16.msra.mxu0 0
    %79 = vmatprep.mubr.bf16.mxu0 0
    %80 = vmatmul.mubr.bf16.gmra.mrb[0].mxu0 %v45
    %v81 = vpop.f32.mrb[0].mxu0
    %v82 = vadd.f32 %v35, %v81
    %v83 = vpop.f32.mrb[0].mxu0
    %v84 = vpop.f32.mrb[0].mxu0
    %v85 = vpop.f32.mrb[0].mxu0
    %86 = vdwg.mxu0
    %v87 = vmax.f32 %v82, 0.0
    %v88 = vld [vmem:[%s3] sm:$0x3]
    %v89 = vpack.c.bf16 %v87, %v87
    %v90 = vld [vmem:[%s4] sm:$0xf]
    %92 = vset.pattern.permute.xlu0 0
    %93 = vperm.xlu0 %92, %v90
    %v94 = vpop.permute.xlu0 %93
    %vm96 = vcmask 31744
    %v98 = vsel %vm96, %v88, 0
    %vm100 = vcmask 1041408
    %v102 = vsel %vm100, %v89, 0
    %104 = vmatprep.subr.bf16.mxu0 0
    %105 = vmatpush1.bf16.msra.mxu0 %v102
    %106 = vmatprep.subr.bf16.mxu0 0
    %107 = vmatpush1.bf16.msra.mxu0 0
    %108 = vmatprep.subr.bf16.mxu0 0
    %109 = vmatpush1.bf16.msra.mxu0 0
    %110 = vmatprep.subr.bf16.mxu0 0
    %111 = vmatpush1.bf16.msra.mxu0 0
    %112 = vmatprep.subr.bf16.mxu0 0
    %113 = vmatpush1.bf16.msra.mxu0 0
    %114 = vmatprep.subr.bf16.mxu0 0
    %115 = vmatpush1.bf16.msra.mxu0 0
    %116 = vmatprep.subr.bf16.mxu0 0
    %117 = vmatpush1.bf16.msra.mxu0 0
    %118 = vmatprep.subr.bf16.mxu0 0
    %119 = vmatpush1.bf16.msra.mxu0 0
    %120 = vmatprep.subr.bf16.mxu0 0
    %121 = vmatpush1.bf16.msra.mxu0 0
    %122 = vmatprep.subr.bf16.mxu0 0
    %123 = vmatpush1.bf16.msra.mxu0 0
    %124 = vmatprep.subr.bf16.mxu0 0
    %125 = vmatpush1.bf16.msra.mxu0 0
    %126 = vmatprep.subr.bf16.mxu0 0
    %127 = vmatpush1.bf16.msra.mxu0 0
    %128 = vmatprep.subr.bf16.mxu0 0
    %129 = vmatpush1.bf16.msra.mxu0 0
    %130 = vmatprep.subr.bf16.mxu0 0
    %131 = vmatpush1.bf16.msra.mxu0 0
    %132 = vmatprep.subr.bf16.mxu0 0
    %133 = vmatpush1.bf16.msra.mxu0 0
    %134 = vmatprep.subr.bf16.mxu0 0
    %135 = vmatpush1.bf16.msra.mxu0 0
    %136 = vmatprep.mubr.bf16.mxu0 0
    %137 = vmatmul.mubr.bf16.gmra.mrb[0].mxu0 %v98
    %v138 = vpop.f32.mrb[0].mxu0
    %v139 = vadd.f32 %v94, %v138
    %v140 = vpop.f32.mrb[0].mxu0
    %v141 = vpop.f32.mrb[0].mxu0
    %v142 = vpop.f32.mrb[0].mxu0
    %143 = vdwg.mxu0
    %v144 = vmax.f32 %v139, 0.0
    %v145 = vld [vmem:[%s5] sm:$0xf]
    %v146 = vld [vmem:[%s5 + $0x4] sm:$0xf]
    %v147 = vpack.c.bf16 %v144, %v144
    %v148 = vld [vmem:[%s6] sm:$0xff]
    %v149 = vld [vmem:[%s6 + $0x8] sm:$0xff]
    %151 = vset.pattern.permute.xlu0 0
    %152 = vperm.xlu0 %151, %v148
    %v153 = vpop.permute.xlu0 %152
    %156 = vset.pattern.permute.xlu0 0
    %157 = vperm.xlu0 %156, %v149
    %v158 = vpop.permute.xlu0 %157
    %v162 = vunpack.c.l.b16 %v145
    %v163 = vunpack.c.l.b16 %v146
    %v164 = vpack.c.b16 %v163, %v162
    %v166 = vsel %vm96, %v164, 0
    %v169 = vsel %vm100, %v147, 0
    %171 = vmatprep.subr.bf16.mxu0 0
    %172 = vmatpush1.bf16.msra.mxu0 %v169
    %173 = vmatprep.subr.bf16.mxu0 0
    %174 = vmatpush1.bf16.msra.mxu0 0
    %175 = vmatprep.subr.bf16.mxu0 0
    %176 = vmatpush1.bf16.msra.mxu0 0
    %177 = vmatprep.subr.bf16.mxu0 0
    %178 = vmatpush1.bf16.msra.mxu0 0
    %179 = vmatprep.subr.bf16.mxu0 0
    %180 = vmatpush1.bf16.msra.mxu0 0
    %181 = vmatprep.subr.bf16.mxu0 0
    %182 = vmatpush1.bf16.msra.mxu0 0
    %183 = vmatprep.subr.bf16.mxu0 0
    %184 = vmatpush1.bf16.msra.mxu0 0
    %185 = vmatprep.subr.bf16.mxu0 0
    %186 = vmatpush1.bf16.msra.mxu0 0
    %187 = vmatprep.subr.bf16.mxu0 0
    %188 = vmatpush1.bf16.msra.mxu0 0
    %189 = vmatprep.subr.bf16.mxu0 0
    %190 = vmatpush1.bf16.msra.mxu0 0
    %191 = vmatprep.subr.bf16.mxu0 0
    %192 = vmatpush1.bf16.msra.mxu0 0
    %193 = vmatprep.subr.bf16.mxu0 0
    %194 = vmatpush1.bf16.msra.mxu0 0
    %195 = vmatprep.subr.bf16.mxu0 0
    %196 = vmatpush1.bf16.msra.mxu0 0
    %197 = vmatprep.subr.bf16.mxu0 0
    %198 = vmatpush1.bf16.msra.mxu0 0
    %199 = vmatprep.subr.bf16.mxu0 0
    %200 = vmatpush1.bf16.msra.mxu0 0
    %201 = vmatprep.subr.bf16.mxu0 0
    %202 = vmatpush1.bf16.msra.mxu0 0
    %203 = vmatprep.mubr.bf16.mxu0 0
    %204 = vmatmul.mubr.bf16.gmra.mrb[0].mxu0 %v166
    %v205 = vpop.f32.mrb[0].mxu0
    %v206 = vadd.f32 %v153, %v205
    %v207 = vpop.f32.mrb[0].mxu0
    %v208 = vpop.f32.mrb[0].mxu0
    %v209 = vadd.f32 %v158, %v208
    %v210 = vpop.f32.mrb[0].mxu0
    %211 = vdwg.mxu0
    %v212 = vunpack.c.l.bf16 %v28
    %v213 = vunpack.c.l.bf16 %v29
    %v214 = vadd.f32 %v206, %v212
    %v215 = vadd.f32 %v209, %v213
    %v216 = vmax.f32 %v214, 0.0
    %v217 = vmax.f32 %v215, 0.0
    %v218 = vpack.c.bf16 %v217, %v216
    %v220 = vunpack.c.l.b16 %v218
    %v221 = vunpack.c.h.b16 %v218
    %v222 = vpack.c.b16 %v220, %v220
    %v223 = vpack.c.b16 %v221, %v221
    %226 = vst [vmem:[#allocation2] sm:$0xf] %v222
    %227 = vst [vmem:[#allocation2 + $0x4] sm:$0xf] %v223
    // Predicated region
    $region30: #{tpu_custom_call.1} parent=1 // pred_check
      _
    $region31: #{tpu_custom_call.1} parent=1 // pred_check_branch
      %229 = sbr.rel (0) target = $region33
    $region32: #{tpu_custom_call.1} parent=1 // pred_region
      %s231 = ssub.s32 128, 128
      %232 = vsyncadd [#allocation3], %s231
      %s233 = sshll.u32 [#allocation2], 4
      %s234 = int_to_ptr.vmem [resolvable:$true] %s233
      %239 = dma.vmem_to_hbm [thread:$0]  %s234, 128, %s7, [#allocation3], 64, 64, 4
    $region33: #{tpu_custom_call.1} parent=1 // pred_fallthru
      _
    // Predicated region
    $region34: #{tpu_custom_call.1} parent=1 // pred_check
      _
    $region35: #{tpu_custom_call.1} parent=1 // pred_check_branch
      %241 = sbr.rel (0) target = $region37
    $region36: #{tpu_custom_call.1} parent=1 // pred_region
      %242 = dma.done [#allocation3], 128
    $region37: #{tpu_custom_call.1} parent=1 // pred_fallthru
      _
    %243 = vsyncpa [#allocation3], 1

</llo_original>
